<compile_context>
chip_gen: v7x
topology: tpu7x:2x2x1
jax: 0.10.0
libtpu: 0.0.40
codegen_flags: <defaults>
</compile_context>

<pallas_src>
import jax
import jax.numpy as jnp
from jax.experimental import pallas as pl
from jax.experimental.pallas import tpu as pltpu

HIDDEN = 32
MID = 512
NUM_CLASS = 10
NUM_CLASS_PAD = 128          # lane-dense output / full MXU tile for matmul #2
BATCH = 8
EPS = 1e-5
NEG_SLOPE = 512.0            # nn.LeakyReLU(512)
MASK_NEG = -1e30             # "-inf" stand-in baked into padded bias lanes

TB_MAX = 512                 # batch-tile cap (multiple of 128; VMEM-safe on all gens)
SUBLANE = 16                 # bf16 sublane packing granularity


def _mlp_kernel(x_ref, w1_ref, b1_ref, w2_ref, b2_ref, o_ref):
    # ---- Linear(hidden -> 512); BatchNorm1d(hidden) pre-folded into w1'/b1' ----
    # x already bf16; bf16 x bf16 MXU matmul with f32 accumulation.
    h = jnp.dot(x_ref[...], w1_ref[...], preferred_element_type=jnp.float32)
    h = h + b1_ref[...]

    # ---- Dropout(0.5): identity in eval ----
    # ---- LeakyReLU(negative_slope=512), f32 elementwise ----
    h = jnp.where(h >= 0.0, h, NEG_SLOPE * h)

    # ---- Linear(512 -> num_class, padded to 128 lanes); BatchNorm1d(512) folded ----
    # Padded w2 columns are exactly zero and padded b2 lanes are MASK_NEG, so the
    # padded logits come out as ~-1e30 with no extra masking ops needed here.
    logits = jnp.dot(h.astype(jnp.bfloat16), w2_ref[...],
                     preferred_element_type=jnp.float32)
    logits = logits + b2_ref[...]

    # ---- Dropout(0.5): identity in eval ----
    # ---- Softmax over dim=1 (f32 math; bf16 store) ----
    m = jnp.max(logits, axis=-1, keepdims=True)
    e = jnp.exp(logits - m)
    inv = pl.reciprocal(jnp.sum(e, axis=-1, keepdims=True), approx=True)
    o_ref[...] = (e * inv).astype(o_ref.dtype)


def _fold_bn_into_linear(gamma, beta, mean, var, w, b):
    """Fold eval-mode BatchNorm1d preceding Linear (w: (in,out), b: (out,)).

      ((x - mean) * gamma * rsqrt(var + eps) + beta) @ w + b
    = x @ (scale[:, None] * w) + ((beta - mean * scale) @ w + b)
    """
    scale = gamma * jax.lax.rsqrt(var + EPS)
    w_f = w * scale[:, None]
    b_f = (beta - mean * scale) @ w + b
    return w_f, b_f


def prepare_params(params):
    """Host-side param prep: BN folding, class-dim padding, mask-in-bias, bf16 cast."""
    w1f, b1f = _fold_bn_into_linear(
        params["bn1_gamma"], params["bn1_beta"],
        params["bn1_mean"], params["bn1_var"],
        params["w1"], params["b1"])
    w2f, b2f = _fold_bn_into_linear(
        params["bn2_gamma"], params["bn2_beta"],
        params["bn2_mean"], params["bn2_var"],
        params["w2"], params["b2"])

    # Pad class dim to 128 lanes.  Weights: zeros in padded columns.
    # Bias: MASK_NEG in padded lanes -> logits there are ~-1e30 and the softmax
    # zeroes them without any in-kernel masking.  (b2 must stay f32 and the
    # padded w2 columns must stay exactly zero for this to be exact.)
    w2p = jnp.zeros((w2f.shape[0], NUM_CLASS_PAD), jnp.float32)
    w2p = w2p.at[:, :NUM_CLASS].set(w2f)
    b2p = jnp.full((NUM_CLASS_PAD,), MASK_NEG, jnp.float32).at[:NUM_CLASS].set(b2f)

    return {
        "w1": w1f.astype(jnp.bfloat16),                    # (H, 512)   bf16
        "b1": b1f.reshape(1, -1).astype(jnp.float32),      # (1, 512)   f32
        "w2": w2p.astype(jnp.bfloat16),                    # (512, 128) bf16
        "b2": b2p.reshape(1, -1).astype(jnp.float32),      # (1, 128)   f32 (masked)
    }


def _choose_tile(B):
    """Capped batch tile: multiple of 16 (bf16 sublanes); 512 cap; never tb=B blowup."""
    if B <= TB_MAX:
        tb = ((B + SUBLANE - 1) // SUBLANE) * SUBLANE
    else:
        tb = TB_MAX
    b_pad = pl.cdiv(B, tb) * tb
    return tb, b_pad


def mlp_forward(x, prep):
    # PyTorch: if len(x.shape) >= 3: x = x.view(B, x.shape[2])
    if x.ndim >= 3:
        x = jnp.reshape(x, (x.shape[0], x.shape[2]))

    B, H = x.shape
    w1, b1, w2, b2 = prep["w1"], prep["b1"], prep["w2"], prep["b2"]
    mid = w1.shape[1]
    n_pad = w2.shape[1]

    # Pre-cast activations to bf16 (halves the x HBM->VMEM stream).
    x = x.astype(jnp.bfloat16)

    tb, b_padded = _choose_tile(B)
    if b_padded != B:
        x = jnp.pad(x, ((0, b_padded - B), (0, 0)))
    grid = (b_padded // tb,)

    out = pl.pallas_call(
        _mlp_kernel,
        out_shape=jax.ShapeDtypeStruct((b_padded, n_pad), jnp.bfloat16),
        grid=grid,
        in_specs=[
            pl.BlockSpec((tb, H), lambda i: (i, 0)),        # x tile per grid step
            pl.BlockSpec((H, mid), lambda i: (0, 0)),       # w1' resident
            pl.BlockSpec((1, mid), lambda i: (0, 0)),       # b1' resident
            pl.BlockSpec((mid, n_pad), lambda i: (0, 0)),   # w2' resident
            pl.BlockSpec((1, n_pad), lambda i: (0, 0)),     # b2' resident (mask baked in)
        ],
        out_specs=pl.BlockSpec((tb, n_pad), lambda i: (i, 0)),
        compiler_params=pltpu.CompilerParams(
            dimension_semantics=("parallel",)),
    )(x, w1, b1, w2, b2)

    # Drop batch padding and the padded class lanes.  (A consumer that can work
    # on the padded (b_padded, 128) bf16 slab could defer/fuse this slice.)
    return out[:B, :NUM_CLASS]


def mlp_reference(x, prep):
    """Pure-JAX reference using the same prepared (folded, bf16) params."""
    if x.ndim >= 3:
        x = jnp.reshape(x, (x.shape[0], x.shape[2]))
    h = jnp.dot(x.astype(jnp.bfloat16), prep["w1"],
                preferred_element_type=jnp.float32) + prep["b1"]
    h = jnp.where(h >= 0.0, h, NEG_SLOPE * h)
    logits = jnp.dot(h.astype(jnp.bfloat16), prep["w2"],
                     preferred_element_type=jnp.float32) + prep["b2"]
    logits = logits[:, :NUM_CLASS]
    return jax.nn.softmax(logits, axis=-1)


def init_params(key):
    """PyTorch-style parameters (Linear weights stored as (in, out))."""
    k1, k2, k3, k4 = jax.random.split(key, 4)
    bound1 = 1.0 / jnp.sqrt(HIDDEN)
    bound2 = 1.0 / jnp.sqrt(MID)
    return {
        # BatchNorm1d(hidden): PyTorch init / running-stat values
        "bn1_gamma": jnp.ones((HIDDEN,), jnp.float32),
        "bn1_beta": jnp.zeros((HIDDEN,), jnp.float32),
        "bn1_mean": jnp.zeros((HIDDEN,), jnp.float32),
        "bn1_var": jnp.ones((HIDDEN,), jnp.float32),
        "w1": jax.random.uniform(k1, (HIDDEN, MID), jnp.float32, -bound1, bound1),
        "b1": jax.random.uniform(k2, (MID,), jnp.float32, -bound1, bound1),
        # BatchNorm1d(512)
        "bn2_gamma": jnp.ones((MID,), jnp.float32),
        "bn2_beta": jnp.zeros((MID,), jnp.float32),
        "bn2_mean": jnp.zeros((MID,), jnp.float32),
        "bn2_var": jnp.ones((MID,), jnp.float32),
        "w2": jax.random.uniform(k3, (MID, NUM_CLASS), jnp.float32, -bound2, bound2),
        "b2": jax.random.uniform(k4, (NUM_CLASS,), jnp.float32, -bound2, bound2),
    }


if __name__ == "__main__":
    key = jax.random.PRNGKey(0)
    kx, kp = jax.random.split(key)
    params = init_params(kp)
    prep = prepare_params(params)

    # Input mimics the (B, 1, hidden) case that triggers the .view() branch.
    x = jax.random.normal(kx, (BATCH, 1, HIDDEN), jnp.float32)

    out = mlp_forward(x, prep)
    out = jax.block_until_ready(out)

    # Sanity: shape, softmax rows sum to ~1, and agreement with pure-JAX ref.
    assert out.shape == (BATCH, NUM_CLASS)
    out_f32 = out.astype(jnp.float32)
    row_sums = jnp.sum(out_f32, axis=-1)
    assert bool(jnp.all(jnp.abs(row_sums - 1.0) < 1e-2))
    ref = mlp_reference(x, prep)
    assert bool(jnp.all(jnp.abs(out_f32 - ref) < 2e-2))

    print("KERNEL_OK")
</pallas_src>

<mosaic_0001>
module attributes {stable_mosaic.version = 11 : i64} {
  func.func @_mlp_kernel(%arg0: i32, %arg1: memref<16x32xbf16, #tpu.memory_space<vmem>>, %arg2: memref<32x512xbf16, #tpu.memory_space<vmem>>, %arg3: memref<1x512xf32, #tpu.memory_space<vmem>>, %arg4: memref<512x128xbf16, #tpu.memory_space<vmem>>, %arg5: memref<1x128xf32, #tpu.memory_space<vmem>>, %arg6: memref<16x128xbf16, #tpu.memory_space<vmem>>) attributes {dimension_semantics = [#tpu.dimension_semantics<parallel>], iteration_bounds = array<i64: 1>, scalar_prefetch = 0 : i64, scratch_operands = 0 : i64, tpu.core_type = #tpu.core_type<tc>, window_params = [{transform_indices = @transform_0, window_bounds = array<i64: 16, 32>}, {pipeline_mode = #tpu.pipeline_mode<synchronous>, transform_indices = @transform_1, window_bounds = array<i64: 32, 512>}, {pipeline_mode = #tpu.pipeline_mode<synchronous>, transform_indices = @transform_2, window_bounds = array<i64: 1, 512>}, {pipeline_mode = #tpu.pipeline_mode<synchronous>, transform_indices = @transform_3, window_bounds = array<i64: 512, 128>}, {pipeline_mode = #tpu.pipeline_mode<synchronous>, transform_indices = @transform_4, window_bounds = array<i64: 1, 128>}, {transform_indices = @transform_5, window_bounds = array<i64: 16, 128>}]} {
    %c0 = arith.constant 0 : index
    %c0_0 = arith.constant 0 : index
    %0 = vector.load %arg1[%c0, %c0_0] : memref<16x32xbf16, #tpu.memory_space<vmem>>, vector<16x32xbf16>
    %c0_1 = arith.constant 0 : index
    %c0_2 = arith.constant 0 : index
    %1 = vector.load %arg2[%c0_1, %c0_2] : memref<32x512xbf16, #tpu.memory_space<vmem>>, vector<32x512xbf16>
    %cst = arith.constant dense<0.000000e+00> : vector<16x512xf32>
    %2 = tpu.matmul %0, %1, %cst {dimension_numbers = #tpu.dot_dimension_numbers<[1], [0], [0], [1], [0, 0, 1, 1], [], []>} : vector<16x32xbf16>, vector<32x512xbf16>, vector<16x512xf32> -> vector<16x512xf32>
    %c0_3 = arith.constant 0 : index
    %c0_4 = arith.constant 0 : index
    %3 = vector.load %arg3[%c0_3, %c0_4] : memref<1x512xf32, #tpu.memory_space<vmem>>, vector<1x512xf32>
    %4 = vector.broadcast %3 : vector<1x512xf32> to vector<16x512xf32>
    %5 = arith.addf %2, %4 : vector<16x512xf32>
    %cst_5 = arith.constant 0.000000e+00 : f32
    %6 = vector.broadcast %cst_5 : f32 to vector<16x512xf32>
    %7 = arith.cmpf oge, %5, %6 : vector<16x512xf32>
    %cst_6 = arith.constant 5.120000e+02 : f32
    %8 = vector.broadcast %cst_6 : f32 to vector<16x512xf32>
    %9 = arith.mulf %8, %5 : vector<16x512xf32>
    %10 = arith.select %7, %5, %9 : vector<16x512xi1>, vector<16x512xf32>
    %11 = arith.truncf %10 : vector<16x512xf32> to vector<16x512xbf16>
    %c0_7 = arith.constant 0 : index
    %c0_8 = arith.constant 0 : index
    %12 = vector.load %arg4[%c0_7, %c0_8] : memref<512x128xbf16, #tpu.memory_space<vmem>>, vector<512x128xbf16>
    %cst_9 = arith.constant dense<0.000000e+00> : vector<16x128xf32>
    %13 = tpu.matmul %11, %12, %cst_9 {dimension_numbers = #tpu.dot_dimension_numbers<[1], [0], [0], [1], [0, 0, 1, 1], [], []>} : vector<16x512xbf16>, vector<512x128xbf16>, vector<16x128xf32> -> vector<16x128xf32>
    %c0_10 = arith.constant 0 : index
    %c0_11 = arith.constant 0 : index
    %14 = vector.load %arg5[%c0_10, %c0_11] : memref<1x128xf32, #tpu.memory_space<vmem>>, vector<1x128xf32>
    %15 = vector.broadcast %14 : vector<1x128xf32> to vector<16x128xf32>
    %16 = arith.addf %13, %15 : vector<16x128xf32>
    %cst_12 = arith.constant dense<0xFF800000> : vector<16xf32>
    %17 = vector.multi_reduction <maximumf>, %16, %cst_12 [1] : vector<16x128xf32> to vector<16xf32>
    %18 = vector.shape_cast %17 : vector<16xf32> to vector<16x1xf32>
    %19 = vector.broadcast %18 : vector<16x1xf32> to vector<16x128xf32>
    %20 = arith.subf %16, %19 : vector<16x128xf32>
    %21 = math.exp %20 : vector<16x128xf32>
    %cst_13 = arith.constant dense<0.000000e+00> : vector<16xf32>
    %22 = vector.multi_reduction <add>, %21, %cst_13 [1] : vector<16x128xf32> to vector<16xf32>
    %23 = vector.shape_cast %22 : vector<16xf32> to vector<16x1xf32>
    %24 = tpu.reciprocal %23 {approx = true} : vector<16x1xf32> -> vector<16x1xf32>
    %25 = vector.broadcast %24 : vector<16x1xf32> to vector<16x128xf32>
    %26 = arith.mulf %21, %25 : vector<16x128xf32>
    %27 = arith.truncf %26 : vector<16x128xf32> to vector<16x128xbf16>
    %c0_14 = arith.constant 0 : index
    %c0_15 = arith.constant 0 : index
    %28 = vector.load %arg6[%c0_14, %c0_15] : memref<16x128xbf16, #tpu.memory_space<vmem>>, vector<16x128xbf16>
    tpu.vector_store %arg6[%c0_14, %c0_15], %27 {strides = array<i32>} : memref<16x128xbf16, #tpu.memory_space<vmem>>, vector<16x128xbf16>,
    return
  }
  func.func @transform_0(%arg0: i32) -> (i32, i32) {
    %c0_i32 = arith.constant 0 : i32
    %c0_i32_0 = arith.constant 0 : i32
    return %arg0, %c0_i32 : i32, i32
  }
  func.func @transform_1(%arg0: i32) -> (i32, i32) {
    %c0_i32 = arith.constant 0 : i32
    %c0_i32_0 = arith.constant 0 : i32
    %c0_i32_1 = arith.constant 0 : i32
    return %c0_i32, %c0_i32_0 : i32, i32
  }
  func.func @transform_2(%arg0: i32) -> (i32, i32) {
    %c0_i32 = arith.constant 0 : i32
    %c0_i32_0 = arith.constant 0 : i32
    %c0_i32_1 = arith.constant 0 : i32
    return %c0_i32, %c0_i32_0 : i32, i32
  }
  func.func @transform_3(%arg0: i32) -> (i32, i32) {
    %c0_i32 = arith.constant 0 : i32
    %c0_i32_0 = arith.constant 0 : i32
    %c0_i32_1 = arith.constant 0 : i32
    return %c0_i32, %c0_i32_0 : i32, i32
  }
  func.func @transform_4(%arg0: i32) -> (i32, i32) {
    %c0_i32 = arith.constant 0 : i32
    %c0_i32_0 = arith.constant 0 : i32
    %c0_i32_1 = arith.constant 0 : i32
    return %c0_i32, %c0_i32_0 : i32, i32
  }
  func.func @transform_5(%arg0: i32) -> (i32, i32) {
    %c0_i32 = arith.constant 0 : i32
    %c0_i32_0 = arith.constant 0 : i32
    return %arg0, %c0_i32 : i32, i32
  }
}

</mosaic_0001>

<llo_original>
// kernel: tpu_custom_call.1
$region0: #{tpu_custom_call.1}
  #allocation0 [shape = 'u32[]', space=smem, size = 0x4, offset = 0x4, fixed_abs, tag = 'smem constant byte address 0x4 - core index']
  #allocation1 [shape = 'u32[144,128]{1,0:T(1,128)}', space=vmem, size = 0x12000, scoped, tag = 'internal scratch']
  %s0 = inlined_call_operand.hbm [shape: bf16[16,32], index: 0, kind: input, shape index: {}]
  %s1 = inlined_call_operand.hbm [shape: bf16[32,512], index: 1, kind: input, shape index: {}]
  %s2 = inlined_call_operand.vmem [shape: f32[1,512], index: 2, kind: input, shape index: {}]
  %s3 = inlined_call_operand.hbm [shape: bf16[512,128], index: 3, kind: input, shape index: {}]
  %s4 = inlined_call_operand.vmem [shape: f32[1,128], index: 4, kind: input, shape index: {}]
  %s5 = inlined_call_operand.hbm [shape: bf16[16,128], index: 5, kind: output, shape index: {}]
  %s6 = sld [smem:[#allocation0]]
  $region42: #{tpu_custom_call.1} parent=0
    _
  %s8 = ssub.s32 1, %s6
  %s9 = scalar_select 0, %s8, %s6
  $region1: #{tpu_custom_call.1} parent=0
    #allocation2 [shape = 'u8[4096]{0}', space=vmem, size = 0x1000, scoped, tag = 'input window, operand 0, single buffered']
    #allocation3 [shape = 's32[1]{0}', space=sflag, size = 0x4, scoped, tag = 'scoped memory for tpu_custom_call.1']
    #allocation4 [shape = 's32[1]{0}', space=sflag, size = 0x4, scoped, tag = 'scoped memory for tpu_custom_call.1']
    #allocation5 [shape = 'u8[32768]{0}', space=vmem, size = 0x8000, scoped, tag = 'input window, operand 1, single buffered']
    #allocation6 [shape = 's32[1]{0}', space=sflag, size = 0x4, scoped, tag = 'scoped memory for tpu_custom_call.1']
    #allocation7 [shape = 'u8[131072]{0}', space=vmem, size = 0x20000, scoped, tag = 'input window, operand 3, single buffered']
    #allocation8 [shape = 'u8[4096]{0}', space=vmem, size = 0x1000, scoped, tag = 'output window, operand 0, single buffered']
    %10 = vsyncpa [#allocation3], 0
    %11 = vsyncpa [#allocation6], 0
    %12 = vsyncpa [#allocation4], 0
    // Predicated region
    $region2: #{tpu_custom_call.1} parent=1 // pred_check
      _
    $region3: #{tpu_custom_call.1} parent=1 // pred_check_branch
      %14 = sbr.rel (0) target = $region5
    $region4: #{tpu_custom_call.1} parent=1 // pred_region
      %s16 = ssub.s32 128, 128
      %17 = vsyncadd [#allocation3], %s16
      %s18 = sshll.u32 [#allocation2], 4
      %s19 = int_to_ptr.vmem [resolvable:$true] %s18
      %24 = dma.hbm_to_vmem [thread:$0]  %s0, 128, %s19, [#allocation3], 64, 64, 4
    $region5: #{tpu_custom_call.1} parent=1 // pred_fallthru
      _
    // Predicated region
    $region6: #{tpu_custom_call.1} parent=1 // pred_check
      _
    $region7: #{tpu_custom_call.1} parent=1 // pred_check_branch
      %26 = sbr.rel (0) target = $region9
    $region8: #{tpu_custom_call.1} parent=1 // pred_region
      %s28 = ssub.s32 1024, 1024
      %29 = vsyncadd [#allocation6], %s28
      %s30 = sshll.u32 [#allocation5], 4
      %s31 = int_to_ptr.vmem [resolvable:$true] %s30
      %36 = dma.hbm_to_vmem [thread:$0]  %s1, 1024, %s31, [#allocation6], 256, 256, 16
    $region9: #{tpu_custom_call.1} parent=1 // pred_fallthru
      _
    // Predicated region
    $region10: #{tpu_custom_call.1} parent=1 // pred_check
      _
    $region11: #{tpu_custom_call.1} parent=1 // pred_check_branch
      %38 = sbr.rel (0) target = $region13
    $region12: #{tpu_custom_call.1} parent=1 // pred_region
      _
    $region13: #{tpu_custom_call.1} parent=1 // pred_fallthru
      _
    // Predicated region
    $region14: #{tpu_custom_call.1} parent=1 // pred_check
      _
    $region15: #{tpu_custom_call.1} parent=1 // pred_check_branch
      %40 = sbr.rel (0) target = $region17
    $region16: #{tpu_custom_call.1} parent=1 // pred_region
      %s42 = ssub.s32 4096, 4096
      %43 = vsyncadd [#allocation6], %s42
      %s44 = sshll.u32 [#allocation7], 4
      %s45 = int_to_ptr.vmem [resolvable:$true] %s44
      %50 = dma.hbm_to_vmem [thread:$0]  %s3, 4096, %s45, [#allocation6], 64, 64, 4
    $region17: #{tpu_custom_call.1} parent=1 // pred_fallthru
      _
    // Predicated region
    $region18: #{tpu_custom_call.1} parent=1 // pred_check
      _
    $region19: #{tpu_custom_call.1} parent=1 // pred_check_branch
      %52 = sbr.rel (0) target = $region21
    $region20: #{tpu_custom_call.1} parent=1 // pred_region
      _
    $region21: #{tpu_custom_call.1} parent=1 // pred_fallthru
      _
    // Predicated region
    $region22: #{tpu_custom_call.1} parent=1 // pred_check
      _
    $region23: #{tpu_custom_call.1} parent=1 // pred_check_branch
      %54 = sbr.rel (0) target = $region25
    $region24: #{tpu_custom_call.1} parent=1 // pred_region
      %55 = dma.done [#allocation3], 128
    $region25: #{tpu_custom_call.1} parent=1 // pred_fallthru
      _
    // Predicated region
    $region26: #{tpu_custom_call.1} parent=1 // pred_check
      _
    $region27: #{tpu_custom_call.1} parent=1 // pred_check_branch
      %57 = sbr.rel (0) target = $region29
    $region28: #{tpu_custom_call.1} parent=1 // pred_region
      %58 = dma.done [#allocation6], 1024
    $region29: #{tpu_custom_call.1} parent=1 // pred_fallthru
      _
    // Predicated region
    $region30: #{tpu_custom_call.1} parent=1 // pred_check
      _
    $region31: #{tpu_custom_call.1} parent=1 // pred_check_branch
      %60 = sbr.rel (0) target = $region33
    $region32: #{tpu_custom_call.1} parent=1 // pred_region
      %61 = dma.done [#allocation6], 4096
    $region33: #{tpu_custom_call.1} parent=1 // pred_fallthru
      _
    %v63 = vld [vmem:[#allocation2] sm:$0xf]
    %v64 = vld [vmem:[#allocation2 + $0x4] sm:$0xf]
    %v65 = vld [vmem:[#allocation5] sm:$0xff]
    %v66 = vld [vmem:[#allocation5 + $0x8] sm:$0xff]
    %v67 = vld [vmem:[#allocation5 + $0x10] sm:$0xff]
    %v68 = vld [vmem:[#allocation5 + $0x18] sm:$0xff]
    %v69 = vld [vmem:[#allocation5 + $0x20] sm:$0xff]
    %v70 = vld [vmem:[#allocation5 + $0x28] sm:$0xff]
    %v71 = vld [vmem:[#allocation5 + $0x30] sm:$0xff]
    %v72 = vld [vmem:[#allocation5 + $0x38] sm:$0xff]
    %v73 = vld [vmem:[%s2] sm:$0xf]
    %v75 = vlaneseq
    %v76 = vshrl.u32 %v75, 7
    %v77 = vsub.s32 0, %v76
    %v78 = vrot.slane %v73, %v77
    %v79 = vlaneseq
    %v80 = vshrl.u32 %v79, 7
    %v81 = vsub.s32 1, %v80
    %v82 = vrot.slane %v73, %v81
    %v83 = vlaneseq
    %v84 = vshrl.u32 %v83, 7
    %v85 = vsub.s32 2, %v84
    %v86 = vrot.slane %v73, %v85
    %v87 = vlaneseq
    %v88 = vshrl.u32 %v87, 7
    %v89 = vsub.s32 3, %v88
    %v90 = vrot.slane %v73, %v89
    %v97 = vunpack.c.l.b16 %v63
    %v98 = vunpack.c.l.b16 %v64
    %v99 = vpack.c.b16 %v98, %v97
    %v108 = vunpack.c.l.b16 %v65
    %v109 = vunpack.c.h.b16 %v65
    %v110 = vunpack.c.l.b16 %v66
    %v111 = vunpack.c.h.b16 %v66
    %v112 = vunpack.c.l.b16 %v67
    %v113 = vunpack.c.h.b16 %v67
    %v114 = vunpack.c.l.b16 %v68
    %v115 = vunpack.c.h.b16 %v68
    %v116 = vunpack.c.l.b16 %v69
    %v117 = vunpack.c.h.b16 %v69
    %v118 = vunpack.c.l.b16 %v70
    %v119 = vunpack.c.h.b16 %v70
    %v120 = vunpack.c.l.b16 %v71
    %v121 = vunpack.c.h.b16 %v71
    %v122 = vunpack.c.l.b16 %v72
    %v123 = vunpack.c.h.b16 %v72
    %v124 = vpack.c.b16 %v112, %v108
    %v125 = vpack.c.b16 %v113, %v109
    %v126 = vpack.c.b16 %v114, %v110
    %v127 = vpack.c.b16 %v115, %v111
    %v128 = vpack.c.b16 %v120, %v116
    %v129 = vpack.c.b16 %v121, %v117
    %v130 = vpack.c.b16 %v122, %v118
    %v131 = vpack.c.b16 %v123, %v119
    %vm140 = vcmask 261120
    %v142 = vsel %vm140, %v99, 0
    %144 = vmatprep.subr.bf16.mxu0 %v125
    %145 = vmatpush1.bf16.msra.mxu0 %v124
    %146 = vmatprep.subr.bf16.mxu0 %v129
    %147 = vmatpush1.bf16.msra.mxu0 %v128
    %148 = vmatprep.subr.bf16.mxu0 0
    %149 = vmatpush1.bf16.msra.mxu0 0
    %150 = vmatprep.subr.bf16.mxu0 0
    %151 = vmatpush1.bf16.msra.mxu0 0
    %152 = vmatprep.subr.bf16.mxu0 0
    %153 = vmatpush1.bf16.msra.mxu0 0
    %154 = vmatprep.subr.bf16.mxu0 0
    %155 = vmatpush1.bf16.msra.mxu0 0
    %156 = vmatprep.subr.bf16.mxu0 0
    %157 = vmatpush1.bf16.msra.mxu0 0
    %158 = vmatprep.subr.bf16.mxu0 0
    %159 = vmatpush1.bf16.msra.mxu0 0
    %160 = vmatprep.subr.bf16.mxu0 0
    %161 = vmatpush1.bf16.msra.mxu0 0
    %162 = vmatprep.subr.bf16.mxu0 0
    %163 = vmatpush1.bf16.msra.mxu0 0
    %164 = vmatprep.subr.bf16.mxu0 0
    %165 = vmatpush1.bf16.msra.mxu0 0
    %166 = vmatprep.subr.bf16.mxu0 0
    %167 = vmatpush1.bf16.msra.mxu0 0
    %168 = vmatprep.subr.bf16.mxu0 0
    %169 = vmatpush1.bf16.msra.mxu0 0
    %170 = vmatprep.subr.bf16.mxu0 0
    %171 = vmatpush1.bf16.msra.mxu0 0
    %172 = vmatprep.subr.bf16.mxu0 0
    %173 = vmatpush1.bf16.msra.mxu0 0
    %174 = vmatprep.subr.bf16.mxu0 0
    %175 = vmatpush1.bf16.msra.mxu0 0
    %176 = vmatprep.mubr.bf16.mxu0 0
    %177 = vmatmul.mubr.bf16.gmra.mrb[0].mxu0 %v142
    %v178 = vpop.f32.mrb[0].mxu0
    %v179 = vadd.f32 %v78, %v178
    %v180 = vpop.f32.mrb[0].mxu0
    %v181 = vadd.f32 %v82, %v180
    %v182 = vpop.f32.mrb[0].mxu0
    %v183 = vadd.f32 %v78, %v182
    %v184 = vpop.f32.mrb[0].mxu0
    %v185 = vadd.f32 %v82, %v184
    %186 = vdwg.mxu0
    %187 = vmatprep.subr.bf16.mxu0 %v127
    %188 = vmatpush1.bf16.msra.mxu0 %v126
    %189 = vmatprep.subr.bf16.mxu0 %v131
    %190 = vmatpush1.bf16.msra.mxu0 %v130
    %191 = vmatprep.subr.bf16.mxu0 0
    %192 = vmatpush1.bf16.msra.mxu0 0
    %193 = vmatprep.subr.bf16.mxu0 0
    %194 = vmatpush1.bf16.msra.mxu0 0
    %195 = vmatprep.subr.bf16.mxu0 0
    %196 = vmatpush1.bf16.msra.mxu0 0
    %197 = vmatprep.subr.bf16.mxu0 0
    %198 = vmatpush1.bf16.msra.mxu0 0
    %199 = vmatprep.subr.bf16.mxu0 0
    %200 = vmatpush1.bf16.msra.mxu0 0
    %201 = vmatprep.subr.bf16.mxu0 0
    %202 = vmatpush1.bf16.msra.mxu0 0
    %203 = vmatprep.subr.bf16.mxu0 0
    %204 = vmatpush1.bf16.msra.mxu0 0
    %205 = vmatprep.subr.bf16.mxu0 0
    %206 = vmatpush1.bf16.msra.mxu0 0
    %207 = vmatprep.subr.bf16.mxu0 0
    %208 = vmatpush1.bf16.msra.mxu0 0
    %209 = vmatprep.subr.bf16.mxu0 0
    %210 = vmatpush1.bf16.msra.mxu0 0
    %211 = vmatprep.subr.bf16.mxu0 0
    %212 = vmatpush1.bf16.msra.mxu0 0
    %213 = vmatprep.subr.bf16.mxu0 0
    %214 = vmatpush1.bf16.msra.mxu0 0
    %215 = vmatprep.subr.bf16.mxu0 0
    %216 = vmatpush1.bf16.msra.mxu0 0
    %217 = vmatprep.subr.bf16.mxu0 0
    %218 = vmatpush1.bf16.msra.mxu0 0
    %219 = vmatprep.mubr.bf16.mxu0 0
    %220 = vmatmul.mubr.bf16.gmra.mrb[0].mxu0 %v142
    %v221 = vpop.f32.mrb[0].mxu0
    %v222 = vadd.f32 %v86, %v221
    %v223 = vpop.f32.mrb[0].mxu0
    %v224 = vadd.f32 %v90, %v223
    %v225 = vpop.f32.mrb[0].mxu0
    %v226 = vadd.f32 %v86, %v225
    %v227 = vpop.f32.mrb[0].mxu0
    %v228 = vadd.f32 %v90, %v227
    %229 = vdwg.mxu0
    %vm230 = vcmp.ge.f32.partialorder %v179, 0.0
    %vm231 = vcmp.ge.f32.partialorder %v181, 0.0
    %vm232 = vcmp.ge.f32.partialorder %v222, 0.0
    %vm233 = vcmp.ge.f32.partialorder %v224, 0.0
    %vm234 = vcmp.ge.f32.partialorder %v183, 0.0
    %vm235 = vcmp.ge.f32.partialorder %v185, 0.0
    %vm236 = vcmp.ge.f32.partialorder %v226, 0.0
    %vm237 = vcmp.ge.f32.partialorder %v228, 0.0
    %v238 = vmul.f32 %v179, 512.0
    %v239 = vmul.f32 %v181, 512.0
    %v240 = vmul.f32 %v222, 512.0
    %v241 = vmul.f32 %v224, 512.0
    %v242 = vmul.f32 %v183, 512.0
    %v243 = vmul.f32 %v185, 512.0
    %v244 = vmul.f32 %v226, 512.0
    %v245 = vmul.f32 %v228, 512.0
    %v246 = vsel %vm230, %v179, %v238
    %v247 = vsel %vm231, %v181, %v239
    %v248 = vsel %vm232, %v222, %v240
    %v249 = vsel %vm233, %v224, %v241
    %v250 = vsel %vm234, %v183, %v242
    %v251 = vsel %vm235, %v185, %v243
    %v252 = vsel %vm236, %v226, %v244
    %v253 = vsel %vm237, %v228, %v245
    %v254 = vpack.c.bf16 %v250, %v246
    %v255 = vpack.c.bf16 %v251, %v247
    %v256 = vpack.c.bf16 %v252, %v248
    %v257 = vpack.c.bf16 %v253, %v249
    %v258 = vld [vmem:[#allocation7] sm:$0xf]
    %v259 = vld [vmem:[#allocation7 + $0x4] sm:$0xf]
    %v260 = vld [vmem:[#allocation7 + $0x8] sm:$0xf]
    %v261 = vld [vmem:[#allocation7 + $0xc] sm:$0xf]
    %v262 = vld [vmem:[#allocation7 + $0x10] sm:$0xf]
    %v263 = vld [vmem:[#allocation7 + $0x14] sm:$0xf]
    %v264 = vld [vmem:[#allocation7 + $0x18] sm:$0xf]
    %v265 = vld [vmem:[#allocation7 + $0x1c] sm:$0xf]
    %v266 = vld [vmem:[#allocation7 + $0x20] sm:$0xf]
    %v267 = vld [vmem:[#allocation7 + $0x24] sm:$0xf]
    %v268 = vld [vmem:[#allocation7 + $0x28] sm:$0xf]
    %v269 = vld [vmem:[#allocation7 + $0x2c] sm:$0xf]
    %v270 = vld [vmem:[#allocation7 + $0x30] sm:$0xf]
    %v271 = vld [vmem:[#allocation7 + $0x34] sm:$0xf]
    %v272 = vld [vmem:[#allocation7 + $0x38] sm:$0xf]
    %v273 = vld [vmem:[#allocation7 + $0x3c] sm:$0xf]
    %v274 = vld [vmem:[#allocation7 + $0x40] sm:$0xf]
    %v275 = vld [vmem:[#allocation7 + $0x44] sm:$0xf]
    %v276 = vld [vmem:[#allocation7 + $0x48] sm:$0xf]
    %v277 = vld [vmem:[#allocation7 + $0x4c] sm:$0xf]
    %v278 = vld [vmem:[#allocation7 + $0x50] sm:$0xf]
    %v279 = vld [vmem:[#allocation7 + $0x54] sm:$0xf]
    %v280 = vld [vmem:[#allocation7 + $0x58] sm:$0xf]
    %v281 = vld [vmem:[#allocation7 + $0x5c] sm:$0xf]
    %v282 = vld [vmem:[#allocation7 + $0x60] sm:$0xf]
    %v283 = vld [vmem:[#allocation7 + $0x64] sm:$0xf]
    %v284 = vld [vmem:[#allocation7 + $0x68] sm:$0xf]
    %v285 = vld [vmem:[#allocation7 + $0x6c] sm:$0xf]
    %v286 = vld [vmem:[#allocation7 + $0x70] sm:$0xf]
    %v287 = vld [vmem:[#allocation7 + $0x74] sm:$0xf]
    %v288 = vld [vmem:[#allocation7 + $0x78] sm:$0xf]
    %v289 = vld [vmem:[#allocation7 + $0x7c] sm:$0xf]
    %v290 = vld [vmem:[#allocation7 + $0x80] sm:$0xf]
    %v291 = vld [vmem:[#allocation7 + $0x84] sm:$0xf]
    %v292 = vld [vmem:[#allocation7 + $0x88] sm:$0xf]
    %v293 = vld [vmem:[#allocation7 + $0x8c] sm:$0xf]
    %v294 = vld [vmem:[#allocation7 + $0x90] sm:$0xf]
    %v295 = vld [vmem:[#allocation7 + $0x94] sm:$0xf]
    %v296 = vld [vmem:[#allocation7 + $0x98] sm:$0xf]
    %v297 = vld [vmem:[#allocation7 + $0x9c] sm:$0xf]
    %v298 = vld [vmem:[#allocation7 + $0xa0] sm:$0xf]
    %v299 = vld [vmem:[#allocation7 + $0xa4] sm:$0xf]
    %v300 = vld [vmem:[#allocation7 + $0xa8] sm:$0xf]
    %v301 = vld [vmem:[#allocation7 + $0xac] sm:$0xf]
    %v302 = vld [vmem:[#allocation7 + $0xb0] sm:$0xf]
    %v303 = vld [vmem:[#allocation7 + $0xb4] sm:$0xf]
    %v304 = vld [vmem:[#allocation7 + $0xb8] sm:$0xf]
    %v305 = vld [vmem:[#allocation7 + $0xbc] sm:$0xf]
    %v306 = vld [vmem:[#allocation7 + $0xc0] sm:$0xf]
    %v307 = vld [vmem:[#allocation7 + $0xc4] sm:$0xf]
    %v308 = vld [vmem:[#allocation7 + $0xc8] sm:$0xf]
    %v309 = vld [vmem:[#allocation7 + $0xcc] sm:$0xf]
    %v310 = vld [vmem:[#allocation7 + $0xd0] sm:$0xf]
    %v311 = vld [vmem:[#allocation7 + $0xd4] sm:$0xf]
    %v312 = vld [vmem:[#allocation7 + $0xd8] sm:$0xf]
    %v313 = vld [vmem:[#allocation7 + $0xdc] sm:$0xf]
    %v314 = vld [vmem:[#allocation7 + $0xe0] sm:$0xf]
    %v315 = vld [vmem:[#allocation7 + $0xe4] sm:$0xf]
    %v316 = vld [vmem:[#allocation7 + $0xe8] sm:$0xf]
    %v317 = vld [vmem:[#allocation7 + $0xec] sm:$0xf]
    %v318 = vld [vmem:[#allocation7 + $0xf0] sm:$0xf]
    %v319 = vld [vmem:[#allocation7 + $0xf4] sm:$0xf]
    %v320 = vld [vmem:[#allocation7 + $0xf8] sm:$0xf]
    %v321 = vld [vmem:[#allocation7 + $0xfc] sm:$0xf]
    %v322 = vld [vmem:[%s4] sm:$0x1]
    %v324 = vlaneseq
    %v325 = vshrl.u32 %v324, 7
    %v326 = vsub.s32 0, %v325
    %v327 = vrot.slane %v322, %v326
    %v393 = vunpack.c.l.b16 %v258
    %v394 = vunpack.c.l.b16 %v259
    %v395 = vunpack.c.l.b16 %v260
    %v396 = vunpack.c.l.b16 %v261
    %v397 = vunpack.c.l.b16 %v262
    %v398 = vunpack.c.l.b16 %v263
    %v399 = vunpack.c.l.b16 %v264
    %v400 = vunpack.c.l.b16 %v265
    %v401 = vunpack.c.l.b16 %v266
    %v402 = vunpack.c.l.b16 %v267
    %v403 = vunpack.c.l.b16 %v268
    %v404 = vunpack.c.l.b16 %v269
    %v405 = vunpack.c.l.b16 %v270
    %v406 = vunpack.c.l.b16 %v271
    %v407 = vunpack.c.l.b16 %v272
    %v408 = vunpack.c.l.b16 %v273
    %v409 = vunpack.c.l.b16 %v274
    %v410 = vunpack.c.l.b16 %v275
    %v411 = vunpack.c.l.b16 %v276
    %v412 = vunpack.c.l.b16 %v277
    %v413 = vunpack.c.l.b16 %v278
    %v414 = vunpack.c.l.b16 %v279
    %v415 = vunpack.c.l.b16 %v280
    %v416 = vunpack.c.l.b16 %v281
    %v417 = vunpack.c.l.b16 %v282
    %v418 = vunpack.c.l.b16 %v283
    %v419 = vunpack.c.l.b16 %v284
    %v420 = vunpack.c.l.b16 %v285
    %v421 = vunpack.c.l.b16 %v286
    %v422 = vunpack.c.l.b16 %v287
    %v423 = vunpack.c.l.b16 %v288
    %v424 = vunpack.c.l.b16 %v289
    %v425 = vunpack.c.l.b16 %v290
    %v426 = vunpack.c.l.b16 %v291
    %v427 = vunpack.c.l.b16 %v292
    %v428 = vunpack.c.l.b16 %v293
    %v429 = vunpack.c.l.b16 %v294
    %v430 = vunpack.c.l.b16 %v295
    %v431 = vunpack.c.l.b16 %v296
    %v432 = vunpack.c.l.b16 %v297
    %v433 = vunpack.c.l.b16 %v298
    %v434 = vunpack.c.l.b16 %v299
    %v435 = vunpack.c.l.b16 %v300
    %v436 = vunpack.c.l.b16 %v301
    %v437 = vunpack.c.l.b16 %v302
    %v438 = vunpack.c.l.b16 %v303
    %v439 = vunpack.c.l.b16 %v304
    %v440 = vunpack.c.l.b16 %v305
    %v441 = vunpack.c.l.b16 %v306
    %v442 = vunpack.c.l.b16 %v307
    %v443 = vunpack.c.l.b16 %v308
    %v444 = vunpack.c.l.b16 %v309
    %v445 = vunpack.c.l.b16 %v310
    %v446 = vunpack.c.l.b16 %v311
    %v447 = vunpack.c.l.b16 %v312
    %v448 = vunpack.c.l.b16 %v313
    %v449 = vunpack.c.l.b16 %v314
    %v450 = vunpack.c.l.b16 %v315
    %v451 = vunpack.c.l.b16 %v316
    %v452 = vunpack.c.l.b16 %v317
    %v453 = vunpack.c.l.b16 %v318
    %v454 = vunpack.c.l.b16 %v319
    %v455 = vunpack.c.l.b16 %v320
    %v456 = vunpack.c.l.b16 %v321
    %v457 = vpack.c.b16 %v394, %v393
    %v458 = vpack.c.b16 %v396, %v395
    %v459 = vpack.c.b16 %v398, %v397
    %v460 = vpack.c.b16 %v400, %v399
    %v461 = vpack.c.b16 %v402, %v401
    %v462 = vpack.c.b16 %v404, %v403
    %v463 = vpack.c.b16 %v406, %v405
    %v464 = vpack.c.b16 %v408, %v407
    %v465 = vpack.c.b16 %v410, %v409
    %v466 = vpack.c.b16 %v412, %v411
    %v467 = vpack.c.b16 %v414, %v413
    %v468 = vpack.c.b16 %v416, %v415
    %v469 = vpack.c.b16 %v418, %v417
    %v470 = vpack.c.b16 %v420, %v419
    %v471 = vpack.c.b16 %v422, %v421
    %v472 = vpack.c.b16 %v424, %v423
    %v473 = vpack.c.b16 %v426, %v425
    %v474 = vpack.c.b16 %v428, %v427
    %v475 = vpack.c.b16 %v430, %v429
    %v476 = vpack.c.b16 %v432, %v431
    %v477 = vpack.c.b16 %v434, %v433
    %v478 = vpack.c.b16 %v436, %v435
    %v479 = vpack.c.b16 %v438, %v437
    %v480 = vpack.c.b16 %v440, %v439
    %v481 = vpack.c.b16 %v442, %v441
    %v482 = vpack.c.b16 %v444, %v443
    %v483 = vpack.c.b16 %v446, %v445
    %v484 = vpack.c.b16 %v448, %v447
    %v485 = vpack.c.b16 %v450, %v449
    %v486 = vpack.c.b16 %v452, %v451
    %v487 = vpack.c.b16 %v454, %v453
    %v488 = vpack.c.b16 %v456, %v455
    %521 = vmatprep.subr.bf16.mxu0 0
    %522 = vmatpush1.bf16.msra.mxu0 %v457
    %523 = vmatprep.subr.bf16.mxu0 0
    %524 = vmatpush1.bf16.msra.mxu0 %v458
    %525 = vmatprep.subr.bf16.mxu0 0
    %526 = vmatpush1.bf16.msra.mxu0 %v459
    %527 = vmatprep.subr.bf16.mxu0 0
    %528 = vmatpush1.bf16.msra.mxu0 %v460
    %529 = vmatprep.subr.bf16.mxu0 0
    %530 = vmatpush1.bf16.msra.mxu0 %v461
    %531 = vmatprep.subr.bf16.mxu0 0
    %532 = vmatpush1.bf16.msra.mxu0 %v462
    %533 = vmatprep.subr.bf16.mxu0 0
    %534 = vmatpush1.bf16.msra.mxu0 %v463
    %535 = vmatprep.subr.bf16.mxu0 0
    %536 = vmatpush1.bf16.msra.mxu0 %v464
    %537 = vmatprep.subr.bf16.mxu0 0
    %538 = vmatpush1.bf16.msra.mxu0 %v465
    %539 = vmatprep.subr.bf16.mxu0 0
    %540 = vmatpush1.bf16.msra.mxu0 %v466
    %541 = vmatprep.subr.bf16.mxu0 0
    %542 = vmatpush1.bf16.msra.mxu0 %v467
    %543 = vmatprep.subr.bf16.mxu0 0
    %544 = vmatpush1.bf16.msra.mxu0 %v468
    %545 = vmatprep.subr.bf16.mxu0 0
    %546 = vmatpush1.bf16.msra.mxu0 %v469
    %547 = vmatprep.subr.bf16.mxu0 0
    %548 = vmatpush1.bf16.msra.mxu0 %v470
    %549 = vmatprep.subr.bf16.mxu0 0
    %550 = vmatpush1.bf16.msra.mxu0 %v471
    %551 = vmatprep.subr.bf16.mxu0 0
    %552 = vmatpush1.bf16.msra.mxu0 %v472
    %553 = vmatprep.mubr.bf16.mxu0 %v255
    %554 = vmatmul.mubr.bf16.gmra.mrb[0].mxu0 %v254
    %v555 = vpop.f32.mrb[0].mxu0
    %v556 = vadd.f32 %v327, %v555
    %v557 = vpop.f32.mrb[0].mxu0
    %v558 = vpop.f32.mrb[0].mxu0
    %v559 = vadd.f32 %v327, %v558
    %v560 = vpop.f32.mrb[0].mxu0
    %561 = vdwg.mxu0
    %562 = vmatprep.subr.bf16.mxu0 0
    %563 = vmatpush1.bf16.msra.mxu0 %v473
    %564 = vmatprep.subr.bf16.mxu0 0
    %565 = vmatpush1.bf16.msra.mxu0 %v474
    %566 = vmatprep.subr.bf16.mxu0 0
    %567 = vmatpush1.bf16.msra.mxu0 %v475
    %568 = vmatprep.subr.bf16.mxu0 0
    %569 = vmatpush1.bf16.msra.mxu0 %v476
    %570 = vmatprep.subr.bf16.mxu0 0
    %571 = vmatpush1.bf16.msra.mxu0 %v477
    %572 = vmatprep.subr.bf16.mxu0 0
    %573 = vmatpush1.bf16.msra.mxu0 %v478
    %574 = vmatprep.subr.bf16.mxu0 0
    %575 = vmatpush1.bf16.msra.mxu0 %v479
    %576 = vmatprep.subr.bf16.mxu0 0
    %577 = vmatpush1.bf16.msra.mxu0 %v480
    %578 = vmatprep.subr.bf16.mxu0 0
    %579 = vmatpush1.bf16.msra.mxu0 %v481
    %580 = vmatprep.subr.bf16.mxu0 0
    %581 = vmatpush1.bf16.msra.mxu0 %v482
    %582 = vmatprep.subr.bf16.mxu0 0
    %583 = vmatpush1.bf16.msra.mxu0 %v483
    %584 = vmatprep.subr.bf16.mxu0 0
    %585 = vmatpush1.bf16.msra.mxu0 %v484
    %586 = vmatprep.subr.bf16.mxu0 0
    %587 = vmatpush1.bf16.msra.mxu0 %v485
    %588 = vmatprep.subr.bf16.mxu0 0
    %589 = vmatpush1.bf16.msra.mxu0 %v486
    %590 = vmatprep.subr.bf16.mxu0 0
    %591 = vmatpush1.bf16.msra.mxu0 %v487
    %592 = vmatprep.subr.bf16.mxu0 0
    %593 = vmatpush1.bf16.msra.mxu0 %v488
    %594 = vmatprep.mubr.bf16.mxu0 %v257
    %595 = vmatmul.mubr.bf16.gmra.mrb[0].mxu0 %v256
    %v596 = vpop.f32.mrb[0].mxu0
    %v597 = vadd.f32 %v556, %v596
    %v598 = vpop.f32.mrb[0].mxu0
    %v599 = vpop.f32.mrb[0].mxu0
    %v600 = vadd.f32 %v559, %v599
    %v601 = vpop.f32.mrb[0].mxu0
    %602 = vdwg.mxu0
    %603 = vmax.xlane.f32.xlu0 %v597
    %v604 = vpop.xlane.xlu0 %603
    %605 = vmax.xlane.f32.xlu0 %v600
    %v606 = vpop.xlane.xlu0 %605
    %v607 = vsub.f32 %v597, %v604
    %v608 = vsub.f32 %v600, %v606
    %v609 = vmul.f32 %v607, 1.442695
    %v610 = vpow.pop %v609
    %v611 = vmul.f32 %v608, 1.442695
    %v612 = vpow.pop %v611
    %613 = vadd.xlane.f32.xlu0 %v610
    %v614 = vpop.xlane.xlu0 %613
    %615 = vadd.xlane.f32.xlu0 %v612
    %v616 = vpop.xlane.xlu0 %615
    %v617 = vrcp.pop %v614
    %v618 = vrcp.pop %v616
    %v619 = vmul.f32 %v610, %v617
    %v620 = vmul.f32 %v612, %v618
    %v621 = vpack.c.bf16 %v620, %v619
    %v623 = vunpack.c.l.b16 %v621
    %v624 = vunpack.c.h.b16 %v621
    %v625 = vpack.c.b16 %v623, %v623
    %v626 = vpack.c.b16 %v624, %v624
    %629 = vst [vmem:[#allocation8] sm:$0xf] %v625
    %630 = vst [vmem:[#allocation8 + $0x4] sm:$0xf] %v626
    // Predicated region
    $region34: #{tpu_custom_call.1} parent=1 // pred_check
      _
    $region35: #{tpu_custom_call.1} parent=1 // pred_check_branch
      %632 = sbr.rel (0) target = $region37
    $region36: #{tpu_custom_call.1} parent=1 // pred_region
      %s634 = ssub.s32 128, 128
      %635 = vsyncadd [#allocation4], %s634
      %s636 = sshll.u32 [#allocation8], 4
      %s637 = int_to_ptr.vmem [resolvable:$true] %s636
      %642 = dma.vmem_to_hbm [thread:$0]  %s637, 128, %s5, [#allocation4], 64, 64, 4
    $region37: #{tpu_custom_call.1} parent=1 // pred_fallthru
      _
    // Predicated region
    $region38: #{tpu_custom_call.1} parent=1 // pred_check
      _
    $region39: #{tpu_custom_call.1} parent=1 // pred_check_branch
      %644 = sbr.rel (0) target = $region41
    $region40: #{tpu_custom_call.1} parent=1 // pred_region
      %645 = dma.done [#allocation4], 128
    $region41: #{tpu_custom_call.1} parent=1 // pred_fallthru
      _
    %646 = vsyncpa [#allocation3], 1
    %647 = vsyncpa [#allocation6], 1
    %648 = vsyncpa [#allocation4], 1

</llo_original>
